<compile_context>
chip_gen: v7x
topology: tpu7x:2x2x1
jax: 0.10.0
libtpu: 0.0.40
codegen_flags: <defaults>
</compile_context>

<pallas_src>
import jax
import jax.numpy as jnp
from jax.experimental import pallas as pl
from jax.experimental.pallas import tpu as pltpu


# ----------------------------- sizing helpers ------------------------------

def _round_up(x, m):
    return ((x + m - 1) // m) * m


def _sublane_multiple(dtype):
    # f32 -> 8 rows per vreg, bf16 -> 16, int8/fp8 -> 32.
    return 8 * max(1, 4 // jnp.dtype(dtype).itemsize)


def _padded_tile_bytes(rows, cols, dtype):
    """VMEM bytes of a (rows, cols) tile after (sublane, lane) padding."""
    return (_round_up(max(rows, 1), _sublane_multiple(dtype))
            * _round_up(max(cols, 1), 128)
            * jnp.dtype(dtype).itemsize)


def _vmem_budget_bytes():
    """Per-generation VMEM budget: ~1/3 of physical VMEM, clamped.
    v7x (64 MiB/TC) -> ~21 MiB; v5e/v6e (128 MiB) -> 40 MiB."""
    cap = 64 << 20
    try:
        cap = int(getattr(pltpu.get_tpu_info(), "vmem_capacity_bytes", cap))
    except Exception:
        pass
    return int(min(40 << 20, max(16 << 20, cap // 3)))


def _choose_block_classes(n_cls, n_ctx, d, dtype, budget_bytes):
    """Largest class-block whose replication scratch + double-buffered ctx
    input fits the (padding-aware) VMEM budget, capped so the grid has >= 2
    steps (v7x megacore) whenever n_cls >= 2."""
    per_class = _padded_tile_bytes(n_ctx, d, dtype)   # one class's ctx rows in VMEM
    ctx_bytes = 2 * per_class                         # double-buffered grid-invariant ctx
    avail = max(per_class, budget_bytes - ctx_bytes)
    bc = max(1, int(avail // per_class))
    if n_cls >= 2:
        bc = min(bc, pl.cdiv(n_cls, 2))               # >= 2 grid blocks
    return int(min(bc, n_cls))


# ------------------------------ module "init" ------------------------------

def init_prompts_base(token_prefix, token_suffix, n_ctx):
    """One-time init (register_buffer equivalent): pre-assemble the prompts
    with the frozen prefix/suffix in place and an empty slot where the learned
    context goes.  forward() only ever rewrites the context rows."""
    n_cls, _, d = token_prefix.shape
    ctx_slot = jnp.zeros((n_cls, n_ctx, d), token_prefix.dtype)
    return jnp.concatenate([token_prefix, ctx_slot, token_suffix], axis=1)


# -------------------------------- forward ----------------------------------

def prompt_learner_forward(ctx, prompts_base, *, block_classes=None):
    """Pallas PromptLearner.forward().

    ctx          : (n_ctx, ctx_dim)     learned generic context (nn.Parameter)
    prompts_base : (n_cls, L, ctx_dim)  pre-assembled prompts (frozen prefix /
                                        suffix already in place); donated and
                                        aliased to the output.
    returns      : (n_cls, L, ctx_dim)  == concat([prefix, ctx, suffix], 1)
    """
    # TODO(synk): class-specific contexts (args.csc, 3-D ctx) would stream
    # per-class ctx blocks instead of broadcasting; only the generic 2-D case
    # (the forward() path shown in the module) is implemented here.
    n_ctx, d = ctx.shape
    n_cls, seq_len, d2 = prompts_base.shape
    assert d == d2 and seq_len >= 1 + n_ctx and n_ctx >= 1
    dtype = prompts_base.dtype

    budget = _vmem_budget_bytes()
    bc = block_classes if block_classes is not None else _choose_block_classes(
        n_cls, n_ctx, d, dtype, budget)
    bc = int(max(1, min(bc, n_cls)))
    num_blocks = pl.cdiv(n_cls, bc)

    per_class = _padded_tile_bytes(n_ctx, d, dtype)
    # Actual VMEM usage: replication scratch + double-buffered ctx input
    # + 2 MiB compiler-scratch headroom.  No double counting.
    vmem_limit = int(min(budget, bc * per_class + 2 * per_class + (2 << 20)))

    def kernel(ctx_ref, base_ref, out_ref, rep_ref, sem_ref):
        # base_ref is the aliased pre-assembled buffer; it is never read (the
        # alias already guarantees prefix/suffix rows are in the output).
        del base_ref

        # Replicate the shared context across the bc classes of this block into
        # the budgeted VMEM scratch.  Leading-axis broadcast -> each result
        # vreg is stored immediately; rebuilt every grid step so the kernel is
        # megacore-safe (scratch is per-core).
        src = ctx_ref[...].astype(rep_ref.dtype)
        rep_ref[...] = jnp.broadcast_to(src[None, :, :], rep_ref.shape)

        # Classes [c0, c0 + bc); the last (possibly partial) block is clamped
        # to end exactly at n_cls.  Overlapped classes are rewritten with
        # identical data -> idempotent and race-free across TensorCores.
        i = pl.program_id(0)
        c0 = jnp.minimum(i * bc, n_cls - bc)

        # One strided DMA per grid step: writes only the n_ctx context rows
        # (token offset 1) of each class straight into the aliased HBM output.
        copy = pltpu.make_async_copy(
            rep_ref,
            out_ref.at[pl.ds(c0, bc), pl.ds(1, n_ctx), :],
            sem_ref,
        )
        copy.start()
        copy.wait()

    grid_spec = pltpu.PrefetchScalarGridSpec(
        num_scalar_prefetch=0,
        grid=(num_blocks,),
        in_specs=[
            # Shared ctx: grid-invariant block, stays resident in VMEM.
            pl.BlockSpec((n_ctx, d), lambda i: (0, 0)),
            # Pre-assembled prompts: raw HBM ref, no auto-DMA (aliased to out).
            pl.BlockSpec(memory_space=pl.ANY),
        ],
        out_specs=pl.BlockSpec(memory_space=pl.ANY),
        scratch_shapes=[
            pltpu.VMEM((bc, n_ctx, d), dtype),   # replication tile feeding the DMA
            pltpu.SemaphoreType.DMA(()),
        ],
    )

    return pl.pallas_call(
        kernel,
        out_shape=jax.ShapeDtypeStruct((n_cls, seq_len, d), dtype),
        grid_spec=grid_spec,
        input_output_aliases={1: 0},   # prompts_base buffer becomes the output
        compiler_params=pltpu.CompilerParams(
            dimension_semantics=("parallel",),   # v7x: shard class-blocks over 2 TCs
            vmem_limit_bytes=vmem_limit,
            has_side_effects=True,               # output written only via manual DMA
        ),
    )(ctx, prompts_base)


def prompt_learner_forward_ref(token_prefix, ctx, token_suffix):
    """Pure-JAX reference matching the PyTorch forward exactly."""
    n_cls = token_prefix.shape[0]
    ctx_expanded = jnp.broadcast_to(ctx[None], (n_cls,) + ctx.shape)
    return jnp.concatenate(
        [token_prefix, ctx_expanded.astype(token_prefix.dtype), token_suffix], axis=1)


# ---------------------------------- demo -----------------------------------

if __name__ == "__main__":
    # Small, self-consistent shapes (CLIP-like but reduced):
    #   n_cls=4 classes, n_ctx=4 context tokens, ctx_dim=128, seq_len=16
    n_cls, n_ctx, ctx_dim, seq_len = 4, 4, 128, 16
    s_suf = seq_len - 1 - n_ctx  # 11

    key = jax.random.PRNGKey(0)
    k_ctx, k_pre, k_suf = jax.random.split(key, 3)

    # Deterministic synthetic parameters / buffers (std=0.02 like nn.init.normal_).
    ctx_vectors = 0.02 * jax.random.normal(k_ctx, (n_ctx, ctx_dim), jnp.float32)
    token_prefix = 0.02 * jax.random.normal(k_pre, (n_cls, 1, ctx_dim), jnp.float32)
    token_suffix = 0.02 * jax.random.normal(k_suf, (n_cls, s_suf, ctx_dim), jnp.float32)
    # TODO(synk): bias_vectors, meta_net, text_features, tokenized_prompts and
    # name_lens are created in __init__ but never used by forward(); omitted.

    # One-time init-time assembly (prefix/suffix are frozen register_buffers).
    base = init_prompts_base(token_prefix, token_suffix, n_ctx)

    fwd = jax.jit(prompt_learner_forward, donate_argnums=(1,),
                  static_argnames=("block_classes",))

    out = jax.block_until_ready(fwd(ctx_vectors, base))
    ref = prompt_learner_forward_ref(token_prefix, ctx_vectors, token_suffix)
    assert out.shape == (n_cls, seq_len, ctx_dim), out.shape
    assert out.dtype == ref.dtype
    assert jnp.allclose(out, ref), "Pallas output mismatch vs reference"

    # Second check: partial final class-block (n_cls=6, block_classes=4 ->
    # grid of 2 with a clamped, overlapping last block).
    n_cls2 = 6
    k_pre2, k_suf2 = jax.random.split(jax.random.PRNGKey(1), 2)
    token_prefix2 = 0.02 * jax.random.normal(k_pre2, (n_cls2, 1, ctx_dim), jnp.float32)
    token_suffix2 = 0.02 * jax.random.normal(k_suf2, (n_cls2, s_suf, ctx_dim), jnp.float32)
    base2 = init_prompts_base(token_prefix2, token_suffix2, n_ctx)

    out2 = jax.block_until_ready(fwd(ctx_vectors, base2, block_classes=4))
    ref2 = prompt_learner_forward_ref(token_prefix2, ctx_vectors, token_suffix2)
    assert out2.shape == (n_cls2, seq_len, ctx_dim), out2.shape
    assert jnp.allclose(out2, ref2), "Pallas output mismatch vs reference (partial block)"

    print("KERNEL_OK")
</pallas_src>

<mosaic_0001>
module attributes {stable_mosaic.version = 11 : i64} {
  func.func @kernel(%arg0: i32, %arg1: memref<4x128xf32, #tpu.memory_space<vmem>>, %arg2: memref<4x16x128xf32, #tpu.memory_space<any>>, %arg3: memref<4x16x128xf32, #tpu.memory_space<any>>, %arg4: memref<2x4x128xf32, #tpu.memory_space<vmem>>, %arg5: memref<!tpu.dma_semaphore, #tpu.memory_space<semaphore_mem>>) attributes {dimension_semantics = [#tpu.dimension_semantics<parallel>], iteration_bounds = array<i64: 2>, scalar_prefetch = 0 : i64, scratch_operands = 2 : i64, tpu.core_type = #tpu.core_type<tc>, window_params = [{pipeline_mode = #tpu.pipeline_mode<synchronous>, transform_indices = @transform_0, window_bounds = array<i64: 4, 128>}, {}, {}]} {
    %c0 = arith.constant 0 : index
    %c0_0 = arith.constant 0 : index
    %0 = vector.load %arg1[%c0, %c0_0] : memref<4x128xf32, #tpu.memory_space<vmem>>, vector<4x128xf32>
    %1 = vector.shape_cast %0 : vector<4x128xf32> to vector<1x4x128xf32>
    %2 = vector.shape_cast %1 : vector<1x4x128xf32> to vector<1x4x128xf32>
    %3 = vector.broadcast %2 : vector<1x4x128xf32> to vector<2x4x128xf32>
    %c0_1 = arith.constant 0 : index
    %c0_2 = arith.constant 0 : index
    %c0_3 = arith.constant 0 : index
    %4 = vector.load %arg4[%c0_1, %c0_2, %c0_3] : memref<2x4x128xf32, #tpu.memory_space<vmem>>, vector<2x4x128xf32>
    tpu.vector_store %arg4[%c0_1, %c0_2, %c0_3], %3 {strides = array<i32>} : memref<2x4x128xf32, #tpu.memory_space<vmem>>, vector<2x4x128xf32>,
    %c2_i32 = arith.constant 2 : i32
    %5 = arith.muli %arg0, %c2_i32 : i32
    %c2_i32_4 = arith.constant 2 : i32
    %6 = arith.minsi %5, %c2_i32_4 : i32
    %c1_i32 = arith.constant 1 : i32
    %c0_i32 = arith.constant 0 : i32
    %7 = tpu.memref_slice %arg3[%6, %c1_i32, %c0_i32] : memref<4x16x128xf32, #tpu.memory_space<any>> -> memref<2x4x128xf32, #tpu.memory_space<any>>
    tpu.enqueue_dma source(%arg4 : memref<2x4x128xf32, #tpu.memory_space<vmem>>) target(%7 : memref<2x4x128xf32, #tpu.memory_space<any>>) target_semaphore(%arg5 : memref<!tpu.dma_semaphore, #tpu.memory_space<semaphore_mem>>)
    %c1_i32_5 = arith.constant 1 : i32
    %c0_i32_6 = arith.constant 0 : i32
    %8 = tpu.memref_slice %arg3[%6, %c1_i32_5, %c0_i32_6] : memref<4x16x128xf32, #tpu.memory_space<any>> -> memref<2x4x128xf32, #tpu.memory_space<any>>
    tpu.wait_dma2 semaphore(%arg5 : memref<!tpu.dma_semaphore, #tpu.memory_space<semaphore_mem>>) src(%arg4 : memref<2x4x128xf32, #tpu.memory_space<vmem>>) dst(%8 : memref<2x4x128xf32, #tpu.memory_space<any>>)
    return
  }
  func.func @transform_0(%arg0: i32) -> (i32, i32) {
    %c0_i32 = arith.constant 0 : i32
    %c0_i32_0 = arith.constant 0 : i32
    %c0_i32_1 = arith.constant 0 : i32
    return %c0_i32, %c0_i32_0 : i32, i32
  }
}

</mosaic_0001>

<llo_original>
// kernel: prompt_learner_forward.1
$region0: #{prompt_learner_forward.1}
  #allocation0 [shape = 'u32[]', space=smem, size = 0x4, offset = 0x4, fixed_abs, tag = 'smem constant byte address 0x4 - core index']
  #allocation1 [shape = 'u32[144,128]{1,0:T(1,128)}', space=vmem, size = 0x12000, scoped, tag = 'internal scratch']
  #allocation2 [shape = 'f32[2,4,128]{2,1,0:T(4,128)}', space=vmem, size = 0x1000, scoped, tag = 'scratch operand']
  #allocation3 [shape = 's32[1]{0}', space=sflag, size = 0x4, scoped, tag = 'scratch operand']
  #allocation6 [shape = 's32[]', space=sflag, size = 0x4, offset = 0, fixed_abs, tag = 'sflag constant byte address 0x0 - dummy sync flag']
  %s0 = inlined_call_operand.hbm [shape: f32[4,128], index: 0, kind: input, shape index: {}]
  %s1 = inlined_call_operand.hbm [shape: f32[4,16,128], index: 1, kind: input, shape index: {}, may-alias: {1,2}]
  %s2 = inlined_call_operand.hbm [shape: f32[4,16,128], index: 2, kind: output, shape index: {}, may-alias: {1,2}]
  %s3 = sld [smem:[#allocation0]]
  $region29: #{prompt_learner_forward.1} parent=0
    _
  %s5 = ssub.s32 1, %s3
  %s6 = scalar_select 0, %s5, %s3
  $region1: #{prompt_learner_forward.1} parent=0
    #allocation4 [shape = 'u8[2048]{0}', space=vmem, size = 0x800, scoped, tag = 'input window, operand 0, single buffered']
    #allocation5 [shape = 's32[2]{0}', space=sflag, size = 0x8, scoped, tag = 'scoped memory for prompt_learner_forward.1']
    %7 = vsyncpa [#allocation5], 0
    loop: start=0, step=1, limit=3
    $region2: #{prompt_learner_forward.1} parent=1 // loop_pre_header
      _
    $region3: #{prompt_learner_forward.1} parent=1 // loop_header
      %s9 = sphi 0, %s13
      %p10 = scmp.ge.s32.totalorder %s9, 3
      %s16 = sphi 0, %s16
      %s18 = sphi 0, %s16
      %s26 = sphi 0, %s18
    $region4: #{prompt_learner_forward.1} parent=1 // loop_header_branch
      %12 = sbr.rel (%p10) target = $region8
    $region5: #{prompt_learner_forward.1} parent=1 // loop_body
      %s14 = ssub.s32 %s9, 1
      %s15 = sadd.s32 %s9, 1
      %s17 = sadd.s32 %s16, 1
      %p19 = scmp.eq.s32.totalorder %s9, 1
      %p20 = scmp.ne.s32.totalorder %s16, %s18
      %p21 = scmp.eq.s32.totalorder %s9, 0
      %p22 = por %p20, %p21
      %p23 = scmp.ne.s32.totalorder %s16, %s18
      %p24 = scmp.eq.s32.totalorder %s14, 1
      %p25 = por %p23, %p24
      %p27 = scmp.ne.s32.totalorder %s18, %s26
      %p28 = scmp.eq.s32.totalorder %s14, 0
      %p29 = por %p27, %p28
      %p30 = scmp.le.s32.totalorder 1, %s9
      // Predicated region
      $region9: #{prompt_learner_forward.1} parent=5 // pred_check
        %p31 = pneg %p30
      $region10: #{prompt_learner_forward.1} parent=5 // pred_check_branch
        %33 = sbr.rel (%p31) target = $region12
      $region11: #{prompt_learner_forward.1} parent=5 // pred_region
        %s34 = ssub.s32 %s9, 1
        // Predicated region
        $region13: #{prompt_learner_forward.1} parent=11 // pred_check
          %p35 = pneg %p29
        $region14: #{prompt_learner_forward.1} parent=11 // pred_check_branch
          %37 = sbr.rel (%p35) target = $region16
        $region15: #{prompt_learner_forward.1} parent=11 // pred_region
          %s39 = ssub.s32 64, 64
          %40 = vsyncadd [#allocation5], %s39
          %s42 = sshll.u32 [#allocation4], 4
          %s43 = int_to_ptr.vmem [resolvable:$true] %s42
          %45 = dma.hbm_to_vmem [thread:$0]  %s0, 64, %s43, [#allocation5]
        $region16: #{prompt_learner_forward.1} parent=11 // pred_fallthru
          _
      $region12: #{prompt_learner_forward.1} parent=5 // pred_fallthru
        _
      %p46 = scmp.lt.s32.totalorder %s9, 2
      // Predicated region
      $region17: #{prompt_learner_forward.1} parent=5 // pred_check
        %p47 = pneg %p46
      $region18: #{prompt_learner_forward.1} parent=5 // pred_check_branch
        %49 = sbr.rel (%p47) target = $region20
      $region19: #{prompt_learner_forward.1} parent=5 // pred_region
        _
      $region20: #{prompt_learner_forward.1} parent=5 // pred_fallthru
        _
      %p50 = scmp.le.s32.totalorder 1, %s9
      // Predicated region
      $region21: #{prompt_learner_forward.1} parent=5 // pred_check
        %p51 = pneg %p50
      $region22: #{prompt_learner_forward.1} parent=5 // pred_check_branch
        %53 = sbr.rel (%p51) target = $region24
      $region23: #{prompt_learner_forward.1} parent=5 // pred_region
        %s54 = ssub.s32 %s9, 1
        // Predicated region
        $region25: #{prompt_learner_forward.1} parent=23 // pred_check
          %p55 = pneg %p29
        $region26: #{prompt_learner_forward.1} parent=23 // pred_check_branch
          %57 = sbr.rel (%p55) target = $region28
        $region27: #{prompt_learner_forward.1} parent=23 // pred_region
          %58 = dma.done [#allocation5], 64
        $region28: #{prompt_learner_forward.1} parent=23 // pred_fallthru
          _
        %p59 = pneg %p29
        %p60 = pneg %p25
        %v61 = vld [vmem:[#allocation4] sm:$0xf]
        %62 = vst [vmem:[#allocation2] sm:$0xf] %v61
        %63 = vst [vmem:[#allocation2 + $0x4] sm:$0xf] %v61
        %s64 = smul.u32 %s14, 2
        %p65 = scmp.lt.s32.totalorder %s64, 2
        %s66 = scalar_select %p65, %s64, 2
        %s67 = smul.u32 %s66, 16
        %s68 = sadd.s32 1, %s67
        %s69 = smul.addr %s68, 16
        %s70 = scalar_lea.hbm %s2, %s69
        %s72 = sshll.u32 [#allocation2], 4
        %s73 = int_to_ptr.vmem [resolvable:$true] %s72
        %75 = dma.vmem_to_hbm [thread:$0]  %s73, 128, %s70, [#allocation3], 64, 256, 4
        %s76 = smul.u32 2, 4
        %s77 = smul.u32 %s76, 1
        %s78 = sshll.u32 %s77, 4
        %79 = dma.done [#allocation3], %s78
      $region24: #{prompt_learner_forward.1} parent=5 // pred_fallthru
        _
    $region6: #{prompt_learner_forward.1} parent=1 // loop_footer
      %s13 = sadd.s32 1, %s9
    $region7: #{prompt_learner_forward.1} parent=1 // loop_footer_branch
      %8 = sbr.rel target = $region3
    $region8: #{prompt_learner_forward.1} parent=1 // loop_exit
      _
    %80 = vsyncpa [#allocation5], 1
    %s81 = scalar_lea.sflag [#allocation5], 1
    %82 = vsyncpa %s81, 1
  %83 = vsyncmov [#allocation3]
  %s84 = vpop.sfrf %83
  %p85 = scmp.eq.s32.totalorder %s84, 0
  %p86 = pneg %p85
  %88 = shalt.err (%p86)

</llo_original>
